<compile_context>
chip_gen: v7x
topology: tpu7x:2x2x1
jax: 0.10.0
libtpu: 0.0.40
codegen_flags: <defaults>
</compile_context>

<pallas_src>
import math
from typing import List, Optional

import jax
import jax.numpy as jnp
from jax.experimental import pallas as pl
from jax.experimental.pallas import tpu as pltpu


# ------------------------------- Pallas kernel -------------------------------

def _make_modality_weights_kernel(n_mods: int):
    """Build a kernel for a fixed (trace-time) number of modalities."""

    def kernel(w_ref, b_ref, *refs):
        # w_ref : (1, F)   nn.Linear(F, 1).weight            (VMEM, resident)
        # b_ref : (1, 1)   nn.Linear(F, 1).bias              (SMEM scalar)
        # refs  : n_mods input refs (TM, F) then n_mods output refs (TM, F)
        x_refs = refs[:n_mods]
        o_refs = refs[n_mods:]

        wf = w_ref[...].astype(jnp.float32)                  # (1, F)
        b = b_ref[0, 0]

        xs = [r[...] for r in x_refs]                        # native dtype tiles

        # Per-row scalar score for each modality: s_i[m] = sum_f x_i[m,f]*w[f] + b
        scores = [
            jnp.sum(x.astype(jnp.float32) * wf, axis=-1, keepdims=True) + b  # (TM, 1)
            for x in xs
        ]

        # Numerically stable softmax over the modality axis (small python-level list).
        m = scores[0]
        for s in scores[1:]:
            m = jnp.maximum(m, s)
        exps = [jnp.exp(s - m) for s in scores]
        denom = exps[0]
        for e in exps[1:]:
            denom = denom + e
        inv = 1.0 / denom                                    # exact divide; op is mem-bound

        # Reweight features: broadcast the per-row weight along the lane (F) axis,
        # cast once at the store.
        for x, e, o_ref in zip(xs, exps, o_refs):
            o_ref[...] = (x.astype(jnp.float32) * (e * inv)).astype(o_ref.dtype)

    return kernel


# --------------------------------- wrapper ------------------------------------

def modality_weights_pallas(mods: List[jnp.ndarray], w: jnp.ndarray, b: jnp.ndarray,
                            *, block_m: int = 1024,
                            vmem_budget_bytes: int = 24 * 1024 * 1024) -> List[jnp.ndarray]:
    """mods: list of (M, F) arrays (same shape/dtype); w: (1, F); b: (1, 1).

    Returns the list of reweighted (M, F) arrays.
    """
    n = len(mods)
    M, F = mods[0].shape
    dtype = mods[0].dtype
    itemsize = jnp.dtype(dtype).itemsize

    # Size TM so (inputs + outputs) * double-buffer fits the VMEM budget.
    bytes_per_row = 2 * 2 * n * F * itemsize
    tm_budget = max(8, (vmem_budget_bytes // max(bytes_per_row, 1)) // 8 * 8)
    tm_cap = min(block_m, tm_budget)
    if M <= tm_cap:
        TM = M                                   # single block == full dim (always legal)
    else:
        TM = max(8, (tm_cap // 8) * 8)           # multiple of 8; ragged tail handled by Pallas
    grid = (pl.cdiv(M, TM),)

    cost = pl.CostEstimate(
        flops=2 * n * M * F + 8 * n * M,
        transcendentals=n * M,
        bytes_accessed=2 * n * M * F * itemsize + (F + 1) * 4,
    )

    mod_in_spec = pl.BlockSpec((TM, F), lambda i: (i, 0))
    mod_out_spec = pl.BlockSpec((TM, F), lambda i: (i, 0))

    out = pl.pallas_call(
        _make_modality_weights_kernel(n),
        out_shape=tuple(jax.ShapeDtypeStruct((M, F), dtype) for _ in range(n)),
        grid=grid,
        in_specs=[
            pl.BlockSpec((1, F), lambda i: (0, 0)),                # weight: resident
            pl.BlockSpec(memory_space=pltpu.MemorySpace.SMEM),     # bias scalar in SMEM
        ] + [mod_in_spec] * n,
        out_specs=tuple(mod_out_spec for _ in range(n)),
        compiler_params=pltpu.CompilerParams(
            dimension_semantics=("parallel",),                     # megacore-shardable
            vmem_limit_bytes=32 * 1024 * 1024,
        ),
        cost_estimate=cost,
    )(w, b, *mods)

    return list(out)


# ----------------------------- Module equivalent ------------------------------

class ModalityWeightsJAX:
    """JAX/Pallas equivalent of ModalityWeights: a learned scalar score per modality,
    softmax over the modality axis, used to reweight each modality's features."""

    def __init__(self, feature_size: int, key: Optional[jax.Array] = None):
        if key is None:
            key = jax.random.PRNGKey(0)
        kw, kb = jax.random.split(key)
        bound = 1.0 / math.sqrt(feature_size)
        # torch nn.Linear(feature_size, 1): weight (1, F), bias (1,)
        self.w = jax.random.uniform(kw, (1, feature_size), jnp.float32, -bound, bound)
        self.b = jax.random.uniform(kb, (1, 1), jnp.float32, -bound, bound)

    def __call__(self, *mods: jnp.ndarray) -> List[jnp.ndarray]:
        B, L, F = mods[0].shape
        # Merging leading dims is a no-copy reshape; no stacking/copying of activations.
        flat = [m.reshape(B * L, F) for m in mods]
        outs = modality_weights_pallas(flat, self.w, self.b)
        return [o.reshape(B, L, F) for o in outs]


# ----------------------------------- demo -------------------------------------

if __name__ == "__main__":
    key = jax.random.PRNGKey(0)
    B, L, F = 2, 8, 32
    k_t, k_a, k_v = jax.random.split(key, 3)
    text = jax.random.normal(k_t, (B, L, F), jnp.float32)
    audio = jax.random.normal(k_a, (B, L, F), jnp.float32)
    visual = jax.random.normal(k_v, (B, L, F), jnp.float32)

    mw = ModalityWeightsJAX(F, key=jax.random.PRNGKey(1))
    t_p, a_p, v_p = mw(text, audio, visual)
    jax.block_until_ready((t_p, a_p, v_p))

    assert t_p.shape == (B, L, F)
    assert a_p.shape == (B, L, F)
    assert v_p.shape == (B, L, F)

    # Plain-JAX reference, mirroring the PyTorch forward exactly:
    #   weight = softmax(Linear(cat([x.unsqueeze(1)], dim=1)), dim=1)
    #   out_i  = mods_i * weight[:, i]
    stack = jnp.stack([text, audio, visual], axis=1)                    # (B, N, L, F)
    scores = jnp.einsum("bnlf,f->bnl", stack, mw.w[0]) + mw.b[0, 0]     # (B, N, L)
    wts = jax.nn.softmax(scores, axis=1)[..., None]                     # (B, N, L, 1)
    ref = stack * wts
    for i, y in enumerate((t_p, a_p, v_p)):
        assert jnp.allclose(y, ref[:, i], atol=1e-5, rtol=1e-5), f"mismatch on modality {i}"

    print("KERNEL_OK")
</pallas_src>

<mosaic_0001>
module attributes {stable_mosaic.version = 11 : i64} {
  func.func @kernel(%arg0: i32, %arg1: memref<1x32xf32, #tpu.memory_space<vmem>>, %arg2: memref<1x1xf32, #tpu.memory_space<smem>>, %arg3: memref<16x32xf32, #tpu.memory_space<vmem>>, %arg4: memref<16x32xf32, #tpu.memory_space<vmem>>, %arg5: memref<16x32xf32, #tpu.memory_space<vmem>>, %arg6: memref<16x32xf32, #tpu.memory_space<vmem>>, %arg7: memref<16x32xf32, #tpu.memory_space<vmem>>, %arg8: memref<16x32xf32, #tpu.memory_space<vmem>>) attributes {dimension_semantics = [#tpu.dimension_semantics<parallel>], iteration_bounds = array<i64: 1>, scalar_prefetch = 0 : i64, scratch_operands = 0 : i64, tpu.core_type = #tpu.core_type<tc>, window_params = [{pipeline_mode = #tpu.pipeline_mode<synchronous>, transform_indices = @transform_0, window_bounds = array<i64: 1, 32>}, {transform_indices = @transform_1, window_bounds = array<i64: 1, 1>}, {transform_indices = @transform_2, window_bounds = array<i64: 16, 32>}, {transform_indices = @transform_3, window_bounds = array<i64: 16, 32>}, {transform_indices = @transform_4, window_bounds = array<i64: 16, 32>}, {transform_indices = @transform_5, window_bounds = array<i64: 16, 32>}, {transform_indices = @transform_6, window_bounds = array<i64: 16, 32>}, {transform_indices = @transform_7, window_bounds = array<i64: 16, 32>}]} {
    %c0 = arith.constant 0 : index
    %c0_0 = arith.constant 0 : index
    %0 = vector.load %arg1[%c0, %c0_0] : memref<1x32xf32, #tpu.memory_space<vmem>>, vector<1x32xf32>
    %c0_1 = arith.constant 0 : index
    %c0_2 = arith.constant 0 : index
    %1 = memref.load %arg2[%c0_1, %c0_2] : memref<1x1xf32, #tpu.memory_space<smem>>
    %c0_3 = arith.constant 0 : index
    %c0_4 = arith.constant 0 : index
    %2 = vector.load %arg3[%c0_3, %c0_4] : memref<16x32xf32, #tpu.memory_space<vmem>>, vector<16x32xf32>
    %c0_5 = arith.constant 0 : index
    %c0_6 = arith.constant 0 : index
    %3 = vector.load %arg4[%c0_5, %c0_6] : memref<16x32xf32, #tpu.memory_space<vmem>>, vector<16x32xf32>
    %c0_7 = arith.constant 0 : index
    %c0_8 = arith.constant 0 : index
    %4 = vector.load %arg5[%c0_7, %c0_8] : memref<16x32xf32, #tpu.memory_space<vmem>>, vector<16x32xf32>
    %5 = vector.broadcast %0 : vector<1x32xf32> to vector<16x32xf32>
    %6 = arith.mulf %2, %5 : vector<16x32xf32>
    %cst = arith.constant dense<0.000000e+00> : vector<16xf32>
    %7 = vector.multi_reduction <add>, %6, %cst [1] : vector<16x32xf32> to vector<16xf32>
    %8 = vector.shape_cast %7 : vector<16xf32> to vector<16x1xf32>
    %9 = vector.broadcast %1 : f32 to vector<16x1xf32>
    %10 = arith.addf %8, %9 : vector<16x1xf32>
    %11 = vector.broadcast %0 : vector<1x32xf32> to vector<16x32xf32>
    %12 = arith.mulf %3, %11 : vector<16x32xf32>
    %cst_9 = arith.constant dense<0.000000e+00> : vector<16xf32>
    %13 = vector.multi_reduction <add>, %12, %cst_9 [1] : vector<16x32xf32> to vector<16xf32>
    %14 = vector.shape_cast %13 : vector<16xf32> to vector<16x1xf32>
    %15 = vector.broadcast %1 : f32 to vector<16x1xf32>
    %16 = arith.addf %14, %15 : vector<16x1xf32>
    %17 = vector.broadcast %0 : vector<1x32xf32> to vector<16x32xf32>
    %18 = arith.mulf %4, %17 : vector<16x32xf32>
    %cst_10 = arith.constant dense<0.000000e+00> : vector<16xf32>
    %19 = vector.multi_reduction <add>, %18, %cst_10 [1] : vector<16x32xf32> to vector<16xf32>
    %20 = vector.shape_cast %19 : vector<16xf32> to vector<16x1xf32>
    %21 = vector.broadcast %1 : f32 to vector<16x1xf32>
    %22 = arith.addf %20, %21 : vector<16x1xf32>
    %23 = arith.maximumf %10, %16 : vector<16x1xf32>
    %24 = arith.maximumf %23, %22 : vector<16x1xf32>
    %25 = arith.subf %10, %24 : vector<16x1xf32>
    %26 = math.exp %25 : vector<16x1xf32>
    %27 = arith.subf %16, %24 : vector<16x1xf32>
    %28 = math.exp %27 : vector<16x1xf32>
    %29 = arith.subf %22, %24 : vector<16x1xf32>
    %30 = math.exp %29 : vector<16x1xf32>
    %31 = arith.addf %26, %28 : vector<16x1xf32>
    %32 = arith.addf %31, %30 : vector<16x1xf32>
    %cst_11 = arith.constant 1.000000e+00 : f32
    %33 = vector.broadcast %cst_11 : f32 to vector<16x1xf32>
    %34 = arith.divf %33, %32 : vector<16x1xf32>
    %35 = arith.mulf %26, %34 : vector<16x1xf32>
    %36 = vector.broadcast %35 : vector<16x1xf32> to vector<16x32xf32>
    %37 = arith.mulf %2, %36 : vector<16x32xf32>
    %c0_12 = arith.constant 0 : index
    %c0_13 = arith.constant 0 : index
    %38 = vector.load %arg6[%c0_12, %c0_13] : memref<16x32xf32, #tpu.memory_space<vmem>>, vector<16x32xf32>
    tpu.vector_store %arg6[%c0_12, %c0_13], %37 {strides = array<i32>} : memref<16x32xf32, #tpu.memory_space<vmem>>, vector<16x32xf32>,
    %39 = arith.mulf %28, %34 : vector<16x1xf32>
    %40 = vector.broadcast %39 : vector<16x1xf32> to vector<16x32xf32>
    %41 = arith.mulf %3, %40 : vector<16x32xf32>
    %c0_14 = arith.constant 0 : index
    %c0_15 = arith.constant 0 : index
    %42 = vector.load %arg7[%c0_14, %c0_15] : memref<16x32xf32, #tpu.memory_space<vmem>>, vector<16x32xf32>
    tpu.vector_store %arg7[%c0_14, %c0_15], %41 {strides = array<i32>} : memref<16x32xf32, #tpu.memory_space<vmem>>, vector<16x32xf32>,
    %43 = arith.mulf %30, %34 : vector<16x1xf32>
    %44 = vector.broadcast %43 : vector<16x1xf32> to vector<16x32xf32>
    %45 = arith.mulf %4, %44 : vector<16x32xf32>
    %c0_16 = arith.constant 0 : index
    %c0_17 = arith.constant 0 : index
    %46 = vector.load %arg8[%c0_16, %c0_17] : memref<16x32xf32, #tpu.memory_space<vmem>>, vector<16x32xf32>
    tpu.vector_store %arg8[%c0_16, %c0_17], %45 {strides = array<i32>} : memref<16x32xf32, #tpu.memory_space<vmem>>, vector<16x32xf32>,
    return
  }
  func.func @transform_0(%arg0: i32) -> (i32, i32) {
    %c0_i32 = arith.constant 0 : i32
    %c0_i32_0 = arith.constant 0 : i32
    %c0_i32_1 = arith.constant 0 : i32
    return %c0_i32, %c0_i32_0 : i32, i32
  }
  func.func @transform_1(%arg0: i32) -> (i32, i32) {
    %c0_i32 = arith.constant 0 : i32
    %c0_i32_0 = arith.constant 0 : i32
    %c0_i32_1 = arith.constant 0 : i32
    return %c0_i32, %c0_i32_0 : i32, i32
  }
  func.func @transform_2(%arg0: i32) -> (i32, i32) {
    %c0_i32 = arith.constant 0 : i32
    %c0_i32_0 = arith.constant 0 : i32
    return %arg0, %c0_i32 : i32, i32
  }
  func.func @transform_3(%arg0: i32) -> (i32, i32) {
    %c0_i32 = arith.constant 0 : i32
    %c0_i32_0 = arith.constant 0 : i32
    return %arg0, %c0_i32 : i32, i32
  }
  func.func @transform_4(%arg0: i32) -> (i32, i32) {
    %c0_i32 = arith.constant 0 : i32
    %c0_i32_0 = arith.constant 0 : i32
    return %arg0, %c0_i32 : i32, i32
  }
  func.func @transform_5(%arg0: i32) -> (i32, i32) {
    %c0_i32 = arith.constant 0 : i32
    %c0_i32_0 = arith.constant 0 : i32
    return %arg0, %c0_i32 : i32, i32
  }
  func.func @transform_6(%arg0: i32) -> (i32, i32) {
    %c0_i32 = arith.constant 0 : i32
    %c0_i32_0 = arith.constant 0 : i32
    return %arg0, %c0_i32 : i32, i32
  }
  func.func @transform_7(%arg0: i32) -> (i32, i32) {
    %c0_i32 = arith.constant 0 : i32
    %c0_i32_0 = arith.constant 0 : i32
    return %arg0, %c0_i32 : i32, i32
  }
}

</mosaic_0001>

<llo_original>
// kernel: tpu_custom_call.1
$region0: #{tpu_custom_call.1}
  #allocation0 [shape = 'u32[]', space=smem, size = 0x4, offset = 0x4, fixed_abs, tag = 'smem constant byte address 0x4 - core index']
  #allocation1 [shape = 'u32[144,128]{1,0:T(1,128)}', space=vmem, size = 0x12000, scoped, tag = 'internal scratch']
  #allocation2 [shape = 'f32[1,1]{1,0:T(1,128)S(6)}', space=smem, size = 0x200, scoped, tag = 'scoped memory for tpu_custom_call.1']
  %s0 = inlined_call_operand.vmem [shape: f32[1,32], index: 0, kind: input, shape index: {}]
  %s1 = inlined_call_operand.<no memory space> [shape: f32[1,1], index: 1, kind: input, shape index: {}]
  %s2 = inlined_call_operand.hbm [shape: f32[16,32], index: 2, kind: input, shape index: {}]
  %s3 = inlined_call_operand.hbm [shape: f32[16,32], index: 3, kind: input, shape index: {}]
  %s4 = inlined_call_operand.hbm [shape: f32[16,32], index: 4, kind: input, shape index: {}]
  %s5 = inlined_call_operand.hbm [shape: f32[16,32], index: 5, kind: output, shape index: {0}]
  %s6 = inlined_call_operand.hbm [shape: f32[16,32], index: 6, kind: output, shape index: {1}]
  %s7 = inlined_call_operand.hbm [shape: f32[16,32], index: 7, kind: output, shape index: {2}]
  %8 = xla_tuple %s5, %s6, %s7
  %s9 = sld [smem:[#allocation0]]
  $region58: #{tpu_custom_call.1} parent=0
    _
  %s11 = ssub.s32 1, %s9
  %s12 = scalar_select 0, %s11, %s9
  %13 = sst [smem:[#allocation2]] %s1
  $region1: #{tpu_custom_call.1} parent=0
    #allocation3 [shape = 'u8[8192]{0}', space=vmem, size = 0x2000, scoped, tag = 'input window, operand 2, single buffered']
    #allocation4 [shape = 's32[1]{0}', space=sflag, size = 0x4, scoped, tag = 'scoped memory for tpu_custom_call.1']
    #allocation5 [shape = 's32[1]{0}', space=sflag, size = 0x4, scoped, tag = 'scoped memory for tpu_custom_call.1']
    #allocation6 [shape = 'u8[8192]{0}', space=vmem, size = 0x2000, scoped, tag = 'input window, operand 3, single buffered']
    #allocation7 [shape = 's32[1]{0}', space=sflag, size = 0x4, scoped, tag = 'scoped memory for tpu_custom_call.1']
    #allocation8 [shape = 'u8[8192]{0}', space=vmem, size = 0x2000, scoped, tag = 'input window, operand 4, single buffered']
    #allocation9 [shape = 'u8[8192]{0}', space=vmem, size = 0x2000, scoped, tag = 'output window, operand 0, single buffered']
    #allocation10 [shape = 'u8[8192]{0}', space=vmem, size = 0x2000, scoped, tag = 'output window, operand 1, single buffered']
    #allocation11 [shape = 's32[1]{0}', space=sflag, size = 0x4, scoped, tag = 'scoped memory for tpu_custom_call.1']
    #allocation12 [shape = 'u8[8192]{0}', space=vmem, size = 0x2000, scoped, tag = 'output window, operand 2, single buffered']
    %14 = vsyncpa [#allocation4], 0
    %15 = vsyncpa [#allocation7], 0
    %16 = vsyncpa [#allocation5], 0
    %17 = vsyncpa [#allocation11], 0
    // Predicated region
    $region2: #{tpu_custom_call.1} parent=1 // pred_check
      _
    $region3: #{tpu_custom_call.1} parent=1 // pred_check_branch
      %19 = sbr.rel (0) target = $region5
    $region4: #{tpu_custom_call.1} parent=1 // pred_region
      _
    $region5: #{tpu_custom_call.1} parent=1 // pred_fallthru
      _
    // Predicated region
    $region6: #{tpu_custom_call.1} parent=1 // pred_check
      _
    $region7: #{tpu_custom_call.1} parent=1 // pred_check_branch
      %21 = sbr.rel (0) target = $region9
    $region8: #{tpu_custom_call.1} parent=1 // pred_region
      _
    $region9: #{tpu_custom_call.1} parent=1 // pred_fallthru
      _
    // Predicated region
    $region10: #{tpu_custom_call.1} parent=1 // pred_check
      _
    $region11: #{tpu_custom_call.1} parent=1 // pred_check_branch
      %23 = sbr.rel (0) target = $region13
    $region12: #{tpu_custom_call.1} parent=1 // pred_region
      %s25 = ssub.s32 256, 256
      %26 = vsyncadd [#allocation4], %s25
      %s27 = sshll.u32 [#allocation3], 4
      %s28 = int_to_ptr.vmem [resolvable:$true] %s27
      %33 = dma.hbm_to_vmem [thread:$0]  %s2, 256, %s28, [#allocation4], 128, 128, 8
    $region13: #{tpu_custom_call.1} parent=1 // pred_fallthru
      _
    // Predicated region
    $region14: #{tpu_custom_call.1} parent=1 // pred_check
      _
    $region15: #{tpu_custom_call.1} parent=1 // pred_check_branch
      %35 = sbr.rel (0) target = $region17
    $region16: #{tpu_custom_call.1} parent=1 // pred_region
      %s37 = ssub.s32 256, 256
      %38 = vsyncadd [#allocation7], %s37
      %s39 = sshll.u32 [#allocation6], 4
      %s40 = int_to_ptr.vmem [resolvable:$true] %s39
      %45 = dma.hbm_to_vmem [thread:$0]  %s3, 256, %s40, [#allocation7], 128, 128, 8
    $region17: #{tpu_custom_call.1} parent=1 // pred_fallthru
      _
    // Predicated region
    $region18: #{tpu_custom_call.1} parent=1 // pred_check
      _
    $region19: #{tpu_custom_call.1} parent=1 // pred_check_branch
      %47 = sbr.rel (0) target = $region21
    $region20: #{tpu_custom_call.1} parent=1 // pred_region
      %s49 = ssub.s32 256, 256
      %50 = vsyncadd [#allocation7], %s49
      %s51 = sshll.u32 [#allocation8], 4
      %s52 = int_to_ptr.vmem [resolvable:$true] %s51
      %57 = dma.hbm_to_vmem [thread:$0]  %s4, 256, %s52, [#allocation7], 128, 128, 8
    $region21: #{tpu_custom_call.1} parent=1 // pred_fallthru
      _
    // Predicated region
    $region22: #{tpu_custom_call.1} parent=1 // pred_check
      _
    $region23: #{tpu_custom_call.1} parent=1 // pred_check_branch
      %59 = sbr.rel (0) target = $region25
    $region24: #{tpu_custom_call.1} parent=1 // pred_region
      %60 = dma.done [#allocation4], 256
    $region25: #{tpu_custom_call.1} parent=1 // pred_fallthru
      _
    // Predicated region
    $region26: #{tpu_custom_call.1} parent=1 // pred_check
      _
    $region27: #{tpu_custom_call.1} parent=1 // pred_check_branch
      %62 = sbr.rel (0) target = $region29
    $region28: #{tpu_custom_call.1} parent=1 // pred_region
      %63 = dma.done [#allocation7], 256
    $region29: #{tpu_custom_call.1} parent=1 // pred_fallthru
      _
    // Predicated region
    $region30: #{tpu_custom_call.1} parent=1 // pred_check
      _
    $region31: #{tpu_custom_call.1} parent=1 // pred_check_branch
      %65 = sbr.rel (0) target = $region33
    $region32: #{tpu_custom_call.1} parent=1 // pred_region
      %66 = dma.done [#allocation7], 256
    $region33: #{tpu_custom_call.1} parent=1 // pred_fallthru
      _
    %v67 = vld [vmem:[%s0] sm:$0x1]
    %s68 = sld [smem:[#allocation2]]
    %v69 = vld [vmem:[#allocation3] sm:$0xff]
    %v70 = vld [vmem:[#allocation3 + $0x8] sm:$0xff]
    %v71 = vld [vmem:[#allocation6] sm:$0xff]
    %v72 = vld [vmem:[#allocation6 + $0x8] sm:$0xff]
    %v73 = vld [vmem:[#allocation8] sm:$0xff]
    %v74 = vld [vmem:[#allocation8 + $0x8] sm:$0xff]
    %v76 = vlaneseq
    %v77 = vshrl.u32 %v76, 7
    %v78 = vsub.s32 0, %v77
    %v79 = vrot.slane %v67, %v78
    %v81 = vmul.f32 %v69, %v79
    %v82 = vmul.f32 %v70, %v79
    %vm83 = vcmask 261120
    %v84 = vsel %vm83, %v81, 0.0
    %85 = vadd.xlane.f32.xlu0 %v84
    %v86 = vpop.xlane.xlu0 %85
    %v87 = vsel %vm83, %v82, 0.0
    %88 = vadd.xlane.f32.xlu0 %v87
    %v89 = vpop.xlane.xlu0 %88
    %v90 = vstv %s68
    %v91 = vadd.f32 %v86, %v90
    %v92 = vadd.f32 %v89, %v90
    %v93 = vmul.f32 %v71, %v79
    %v94 = vmul.f32 %v72, %v79
    %v95 = vsel %vm83, %v93, 0.0
    %96 = vadd.xlane.f32.xlu0 %v95
    %v97 = vpop.xlane.xlu0 %96
    %v98 = vsel %vm83, %v94, 0.0
    %99 = vadd.xlane.f32.xlu0 %v98
    %v100 = vpop.xlane.xlu0 %99
    %v101 = vadd.f32 %v97, %v90
    %v102 = vadd.f32 %v100, %v90
    %v103 = vmul.f32 %v73, %v79
    %v104 = vmul.f32 %v74, %v79
    %v105 = vsel %vm83, %v103, 0.0
    %106 = vadd.xlane.f32.xlu0 %v105
    %v107 = vpop.xlane.xlu0 %106
    %v108 = vsel %vm83, %v104, 0.0
    %109 = vadd.xlane.f32.xlu0 %v108
    %v110 = vpop.xlane.xlu0 %109
    %v111 = vadd.f32 %v107, %v90
    %v112 = vadd.f32 %v110, %v90
    %v113 = vmax.f32 %v91, %v101
    %v114 = vmax.f32 %v92, %v102
    %v115 = vmax.f32 %v113, %v111
    %v116 = vmax.f32 %v114, %v112
    %v117 = vsub.f32 %v91, %v115
    %v118 = vsub.f32 %v92, %v116
    %v119 = vmul.f32 %v117, 1.442695
    %v120 = vpow.pop %v119
    %v121 = vmul.f32 %v118, 1.442695
    %v122 = vpow.pop %v121
    %v123 = vsub.f32 %v101, %v115
    %v124 = vsub.f32 %v102, %v116
    %v125 = vmul.f32 %v123, 1.442695
    %v126 = vpow.pop %v125
    %v127 = vmul.f32 %v124, 1.442695
    %v128 = vpow.pop %v127
    %v129 = vsub.f32 %v111, %v115
    %v130 = vsub.f32 %v112, %v116
    %v131 = vmul.f32 %v129, 1.442695
    %v132 = vpow.pop %v131
    %v133 = vmul.f32 %v130, 1.442695
    %v134 = vpow.pop %v133
    %v135 = vadd.f32 %v120, %v126
    %v136 = vadd.f32 %v122, %v128
    %v137 = vadd.f32 %v135, %v132
    %v138 = vadd.f32 %v136, %v134
    %v139 = vrcp.pop %v137
    %v140 = vmul.f32 1.0, %v139
    %v141 = vrcp.pop %v138
    %v142 = vmul.f32 1.0, %v141
    %v143 = vmul.f32 %v120, %v140
    %v144 = vmul.f32 %v122, %v142
    %v145 = vmul.f32 %v69, %v143
    %v146 = vmul.f32 %v70, %v144
    %147 = vst.msk [vmem:[#allocation9] sm:$0xff] %vm83, %v145
    %148 = vst.msk [vmem:[#allocation9 + $0x8] sm:$0xff] %vm83, %v146
    %v149 = vmul.f32 %v126, %v140
    %v150 = vmul.f32 %v128, %v142
    %v151 = vmul.f32 %v71, %v149
    %v152 = vmul.f32 %v72, %v150
    %153 = vst.msk [vmem:[#allocation10] sm:$0xff] %vm83, %v151
    %154 = vst.msk [vmem:[#allocation10 + $0x8] sm:$0xff] %vm83, %v152
    %v155 = vmul.f32 %v132, %v140
    %v156 = vmul.f32 %v134, %v142
    %v157 = vmul.f32 %v73, %v155
    %v158 = vmul.f32 %v74, %v156
    %159 = vst.msk [vmem:[#allocation12] sm:$0xff] %vm83, %v157
    %160 = vst.msk [vmem:[#allocation12 + $0x8] sm:$0xff] %vm83, %v158
    // Predicated region
    $region34: #{tpu_custom_call.1} parent=1 // pred_check
      _
    $region35: #{tpu_custom_call.1} parent=1 // pred_check_branch
      %162 = sbr.rel (0) target = $region37
    $region36: #{tpu_custom_call.1} parent=1 // pred_region
      %s164 = ssub.s32 256, 256
      %165 = vsyncadd [#allocation5], %s164
      %s166 = sshll.u32 [#allocation9], 4
      %s167 = int_to_ptr.vmem [resolvable:$true] %s166
      %172 = dma.vmem_to_hbm [thread:$0]  %s167, 256, %s5, [#allocation5], 128, 128, 8
    $region37: #{tpu_custom_call.1} parent=1 // pred_fallthru
      _
    // Predicated region
    $region38: #{tpu_custom_call.1} parent=1 // pred_check
      _
    $region39: #{tpu_custom_call.1} parent=1 // pred_check_branch
      %174 = sbr.rel (0) target = $region41
    $region40: #{tpu_custom_call.1} parent=1 // pred_region
      %s176 = ssub.s32 256, 256
      %177 = vsyncadd [#allocation11], %s176
      %s178 = sshll.u32 [#allocation10], 4
      %s179 = int_to_ptr.vmem [resolvable:$true] %s178
      %184 = dma.vmem_to_hbm [thread:$0]  %s179, 256, %s6, [#allocation11], 128, 128, 8
    $region41: #{tpu_custom_call.1} parent=1 // pred_fallthru
      _
    // Predicated region
    $region42: #{tpu_custom_call.1} parent=1 // pred_check
      _
    $region43: #{tpu_custom_call.1} parent=1 // pred_check_branch
      %186 = sbr.rel (0) target = $region45
    $region44: #{tpu_custom_call.1} parent=1 // pred_region
      %s188 = ssub.s32 256, 256
      %189 = vsyncadd [#allocation11], %s188
      %s190 = sshll.u32 [#allocation12], 4
      %s191 = int_to_ptr.vmem [resolvable:$true] %s190
      %196 = dma.vmem_to_hbm [thread:$0]  %s191, 256, %s7, [#allocation11], 128, 128, 8
    $region45: #{tpu_custom_call.1} parent=1 // pred_fallthru
      _
    // Predicated region
    $region46: #{tpu_custom_call.1} parent=1 // pred_check
      _
    $region47: #{tpu_custom_call.1} parent=1 // pred_check_branch
      %198 = sbr.rel (0) target = $region49
    $region48: #{tpu_custom_call.1} parent=1 // pred_region
      %199 = dma.done [#allocation5], 256
    $region49: #{tpu_custom_call.1} parent=1 // pred_fallthru
      _
    // Predicated region
    $region50: #{tpu_custom_call.1} parent=1 // pred_check
      _
    $region51: #{tpu_custom_call.1} parent=1 // pred_check_branch
      %201 = sbr.rel (0) target = $region53
    $region52: #{tpu_custom_call.1} parent=1 // pred_region
      %202 = dma.done [#allocation11], 256
    $region53: #{tpu_custom_call.1} parent=1 // pred_fallthru
      _
    // Predicated region
    $region54: #{tpu_custom_call.1} parent=1 // pred_check
      _
    $region55: #{tpu_custom_call.1} parent=1 // pred_check_branch
      %204 = sbr.rel (0) target = $region57
    $region56: #{tpu_custom_call.1} parent=1 // pred_region
      %205 = dma.done [#allocation11], 256
    $region57: #{tpu_custom_call.1} parent=1 // pred_fallthru
      _
    %206 = vsyncpa [#allocation4], 1
    %207 = vsyncpa [#allocation7], 1
    %208 = vsyncpa [#allocation5], 1
    %209 = vsyncpa [#allocation11], 1

</llo_original>
